<compile_context>
chip_gen: v7x
topology: tpu7x:2x2x1
jax: 0.10.0
libtpu: 0.0.40
codegen_flags: <defaults>
</compile_context>

<pallas_src>
import jax
import jax.numpy as jnp
from jax.experimental import pallas as pl
from jax.experimental.pallas import tpu as pltpu


def linear_kernel(x_ref, w_ref, b_ref, o_ref):
    # x_ref: (B, IN)   w_ref: (OUT, IN)   b_ref: (1, OUT)   o_ref: (B, OUT)
    x = x_ref[...]                                    # (B, IN)
    w = w_ref[...]                                    # (OUT, IN)
    b = b_ref[...]                                    # (1, OUT)

    in_features = x.shape[1]                          # static (4)

    # Fully unrolled K contraction on the VPU, staying in (B, OUT) layout:
    #   y[b, o] = sum_k x[b, k] * w[o, k]
    acc = x[:, 0:1] * w[:, 0][None, :]                # (B,1)*(1,OUT) -> (B,OUT)
    for k in range(1, in_features):
        acc = acc + x[:, k:k + 1] * w[:, k][None, :]

    o_ref[...] = (acc + b).astype(o_ref.dtype)


def linear_pallas(x, weight, bias):
    """y = x @ weight.T + bias  (torch.nn.Linear semantics, weight is (OUT, IN))."""
    B, IN = x.shape
    OUT, IN2 = weight.shape
    assert IN == IN2
    b2 = bias.reshape(1, OUT)                         # free metadata reshape

    vmem_spec = pl.BlockSpec(memory_space=pltpu.MemorySpace.VMEM)
    cost = pl.CostEstimate(
        flops=2 * B * IN * OUT,
        transcendentals=0,
        bytes_accessed=(B * IN + OUT * IN + OUT + B * OUT) * 4,
    )

    return pl.pallas_call(
        linear_kernel,
        out_shape=jax.ShapeDtypeStruct((B, OUT), x.dtype),
        in_specs=[vmem_spec, vmem_spec, vmem_spec],
        out_specs=vmem_spec,
        cost_estimate=cost,
    )(x, weight, b2)


linear_pallas_jit = jax.jit(linear_pallas)


if __name__ == "__main__":
    key = jax.random.PRNGKey(0)
    k_x, k_w, k_b = jax.random.split(key, 3)

    B, IN, OUT = 2, 4, 5

    # Input: matches `torch.randn(2, 4)`
    x = jax.random.normal(k_x, (B, IN), dtype=jnp.float32)

    # Deterministic parameter init mirroring torch.nn.Linear default:
    # U(-1/sqrt(in_features), 1/sqrt(in_features))
    bound = 1.0 / jnp.sqrt(jnp.float32(IN))
    weight = jax.random.uniform(k_w, (OUT, IN), minval=-bound, maxval=bound,
                                dtype=jnp.float32)
    bias = jax.random.uniform(k_b, (OUT,), minval=-bound, maxval=bound,
                              dtype=jnp.float32)

    y = linear_pallas_jit(x, weight, bias)
    jax.block_until_ready(y)

    # Correctness check against pure-JAX reference.
    y_ref = x @ weight.T + bias
    assert y.shape == (B, OUT)
    assert jnp.allclose(y, y_ref, atol=1e-5, rtol=1e-5), "mismatch vs reference"

    print("KERNEL_OK")
</pallas_src>

<mosaic_0001>
module attributes {stable_mosaic.version = 11 : i64} {
  func.func @linear_kernel(%arg0: memref<2x4xf32, #tpu.memory_space<vmem>>, %arg1: memref<5x4xf32, #tpu.memory_space<vmem>>, %arg2: memref<1x5xf32, #tpu.memory_space<vmem>>, %arg3: memref<2x5xf32, #tpu.memory_space<vmem>>) attributes {dimension_semantics = [], scalar_prefetch = 0 : i64, scratch_operands = 0 : i64, tpu.core_type = #tpu.core_type<tc>} {
    %c0 = arith.constant 0 : index
    %c0_0 = arith.constant 0 : index
    %0 = vector.load %arg0[%c0, %c0_0] : memref<2x4xf32, #tpu.memory_space<vmem>>, vector<2x4xf32>
    %c0_1 = arith.constant 0 : index
    %c0_2 = arith.constant 0 : index
    %1 = vector.load %arg1[%c0_1, %c0_2] : memref<5x4xf32, #tpu.memory_space<vmem>>, vector<5x4xf32>
    %c0_3 = arith.constant 0 : index
    %c0_4 = arith.constant 0 : index
    %2 = vector.load %arg2[%c0_3, %c0_4] : memref<1x5xf32, #tpu.memory_space<vmem>>, vector<1x5xf32>
    %3 = vector.extract_strided_slice %0 {offsets = [0, 0], sizes = [2, 1], strides = [1, 1]} : vector<2x4xf32> to vector<2x1xf32>
    %4 = vector.extract_strided_slice %1 {offsets = [0, 0], sizes = [5, 1], strides = [1, 1]} : vector<5x4xf32> to vector<5x1xf32>
    %5 = vector.shape_cast %4 : vector<5x1xf32> to vector<5xf32>
    %6 = vector.shape_cast %5 : vector<5xf32> to vector<1x5xf32>
    %7 = vector.broadcast %3 : vector<2x1xf32> to vector<2x5xf32>
    %8 = vector.broadcast %6 : vector<1x5xf32> to vector<2x5xf32>
    %9 = arith.mulf %7, %8 : vector<2x5xf32>
    %10 = vector.extract_strided_slice %0 {offsets = [0, 1], sizes = [2, 1], strides = [1, 1]} : vector<2x4xf32> to vector<2x1xf32>
    %11 = vector.extract_strided_slice %1 {offsets = [0, 1], sizes = [5, 1], strides = [1, 1]} : vector<5x4xf32> to vector<5x1xf32>
    %12 = vector.shape_cast %11 : vector<5x1xf32> to vector<5xf32>
    %13 = vector.shape_cast %12 : vector<5xf32> to vector<1x5xf32>
    %14 = vector.broadcast %10 : vector<2x1xf32> to vector<2x5xf32>
    %15 = vector.broadcast %13 : vector<1x5xf32> to vector<2x5xf32>
    %16 = arith.mulf %14, %15 : vector<2x5xf32>
    %17 = arith.addf %9, %16 : vector<2x5xf32>
    %18 = vector.extract_strided_slice %0 {offsets = [0, 2], sizes = [2, 1], strides = [1, 1]} : vector<2x4xf32> to vector<2x1xf32>
    %19 = vector.extract_strided_slice %1 {offsets = [0, 2], sizes = [5, 1], strides = [1, 1]} : vector<5x4xf32> to vector<5x1xf32>
    %20 = vector.shape_cast %19 : vector<5x1xf32> to vector<5xf32>
    %21 = vector.shape_cast %20 : vector<5xf32> to vector<1x5xf32>
    %22 = vector.broadcast %18 : vector<2x1xf32> to vector<2x5xf32>
    %23 = vector.broadcast %21 : vector<1x5xf32> to vector<2x5xf32>
    %24 = arith.mulf %22, %23 : vector<2x5xf32>
    %25 = arith.addf %17, %24 : vector<2x5xf32>
    %26 = vector.extract_strided_slice %0 {offsets = [0, 3], sizes = [2, 1], strides = [1, 1]} : vector<2x4xf32> to vector<2x1xf32>
    %27 = vector.extract_strided_slice %1 {offsets = [0, 3], sizes = [5, 1], strides = [1, 1]} : vector<5x4xf32> to vector<5x1xf32>
    %28 = vector.shape_cast %27 : vector<5x1xf32> to vector<5xf32>
    %29 = vector.shape_cast %28 : vector<5xf32> to vector<1x5xf32>
    %30 = vector.broadcast %26 : vector<2x1xf32> to vector<2x5xf32>
    %31 = vector.broadcast %29 : vector<1x5xf32> to vector<2x5xf32>
    %32 = arith.mulf %30, %31 : vector<2x5xf32>
    %33 = arith.addf %25, %32 : vector<2x5xf32>
    %34 = vector.broadcast %2 : vector<1x5xf32> to vector<2x5xf32>
    %35 = arith.addf %33, %34 : vector<2x5xf32>
    %c0_5 = arith.constant 0 : index
    %c0_6 = arith.constant 0 : index
    %36 = vector.load %arg3[%c0_5, %c0_6] : memref<2x5xf32, #tpu.memory_space<vmem>>, vector<2x5xf32>
    tpu.vector_store %arg3[%c0_5, %c0_6], %35 {strides = array<i32>} : memref<2x5xf32, #tpu.memory_space<vmem>>, vector<2x5xf32>,
    return
  }
}

</mosaic_0001>

<llo_original>
// kernel: linear_pallas.1
$region0: #{linear_pallas.1}
  #allocation0 [shape = 'u32[]', space=smem, size = 0x4, offset = 0x4, fixed_abs, tag = 'smem constant byte address 0x4 - core index']
  #allocation1 [shape = 'u32[144,128]{1,0:T(1,128)}', space=vmem, size = 0x12000, scoped, tag = 'internal scratch']
  %s0 = inlined_call_operand.vmem [shape: f32[2,4], index: 0, kind: input, shape index: {}]
  %s1 = inlined_call_operand.vmem [shape: f32[5,4], index: 1, kind: input, shape index: {}]
  %s2 = inlined_call_operand.vmem [shape: f32[1,5], index: 2, kind: input, shape index: {}]
  %s3 = inlined_call_operand.hbm [shape: f32[2,5], index: 3, kind: output, shape index: {}]
  %s4 = sld [smem:[#allocation0]]
  $region22: #{linear_pallas.1} parent=0
    _
  %s6 = ssub.s32 1, %s4
  %s7 = scalar_select 0, %s6, %s4
  $region1: #{linear_pallas.1} parent=0
    #allocation2 [shape = 'u8[1024]{0}', space=vmem, size = 0x400, scoped, tag = 'output window, operand 0, single buffered']
    #allocation3 [shape = 's32[1]{0}', space=sflag, size = 0x4, scoped, tag = 'scoped memory for linear_pallas.1']
    %8 = vsyncpa [#allocation3], 0
    // Predicated region
    $region2: #{linear_pallas.1} parent=1 // pred_check
      _
    $region3: #{linear_pallas.1} parent=1 // pred_check_branch
      %10 = sbr.rel (0) target = $region5
    $region4: #{linear_pallas.1} parent=1 // pred_region
      _
    $region5: #{linear_pallas.1} parent=1 // pred_fallthru
      _
    // Predicated region
    $region6: #{linear_pallas.1} parent=1 // pred_check
      _
    $region7: #{linear_pallas.1} parent=1 // pred_check_branch
      %12 = sbr.rel (0) target = $region9
    $region8: #{linear_pallas.1} parent=1 // pred_region
      _
    $region9: #{linear_pallas.1} parent=1 // pred_fallthru
      _
    // Predicated region
    $region10: #{linear_pallas.1} parent=1 // pred_check
      _
    $region11: #{linear_pallas.1} parent=1 // pred_check_branch
      %14 = sbr.rel (0) target = $region13
    $region12: #{linear_pallas.1} parent=1 // pred_region
      _
    $region13: #{linear_pallas.1} parent=1 // pred_fallthru
      _
    %v15 = vld [vmem:[%s0] sm:$0x3]
    %v16 = vld [vmem:[%s1] sm:$0x1f]
    %v17 = vld [vmem:[%s2] sm:$0x1]
    %19 = vset.pattern.permute.xlu0 0
    %20 = vperm.xlu0 %19, %v15
    %v21 = vpop.permute.xlu0 %20
    %24 = vset.pattern.permute.xlu0 0
    %25 = vperm.xlu0 %24, %v16
    %v26 = vpop.permute.xlu0 %25
    %v27 = vlaneseq
    %v28 = vand.u32 %v27, 127
    %v29 = vlaneseq
    %v30 = vshrl.u32 %v29, 7
    %v31 = vsub.s32 %v28, %v30
    %v32 = vrot.slane %v26, %v31
    %v34 = vmul.f32 %v21, %v32
    %35 = vset.pattern.permute.xlu0 1
    %36 = vperm.xlu0 %35, %v15
    %v37 = vpop.permute.xlu0 %36
    %39 = vset.pattern.permute.xlu0 1
    %40 = vperm.xlu0 %39, %v16
    %v41 = vpop.permute.xlu0 %40
    %v42 = vlaneseq
    %v43 = vshrl.u32 %v42, 7
    %v44 = vsub.s32 %v28, %v43
    %v45 = vrot.slane %v41, %v44
    %v47 = vmul.f32 %v37, %v45
    %v48 = vadd.f32 %v34, %v47
    %49 = vset.pattern.permute.xlu0 2
    %50 = vperm.xlu0 %49, %v15
    %v51 = vpop.permute.xlu0 %50
    %53 = vset.pattern.permute.xlu0 2
    %54 = vperm.xlu0 %53, %v16
    %v55 = vpop.permute.xlu0 %54
    %v56 = vlaneseq
    %v57 = vshrl.u32 %v56, 7
    %v58 = vsub.s32 %v28, %v57
    %v59 = vrot.slane %v55, %v58
    %v61 = vmul.f32 %v51, %v59
    %v62 = vadd.f32 %v48, %v61
    %63 = vset.pattern.permute.xlu0 3
    %64 = vperm.xlu0 %63, %v15
    %v65 = vpop.permute.xlu0 %64
    %67 = vset.pattern.permute.xlu0 3
    %68 = vperm.xlu0 %67, %v16
    %v69 = vpop.permute.xlu0 %68
    %v70 = vlaneseq
    %v71 = vshrl.u32 %v70, 7
    %v72 = vsub.s32 %v28, %v71
    %v73 = vrot.slane %v69, %v72
    %v75 = vmul.f32 %v65, %v73
    %v76 = vadd.f32 %v62, %v75
    %v78 = vlaneseq
    %v79 = vshrl.u32 %v78, 7
    %v80 = vsub.s32 0, %v79
    %v81 = vrot.slane %v17, %v80
    %v83 = vadd.f32 %v76, %v81
    %vm84 = vcmask 33792
    %85 = vst.msk [vmem:[#allocation2] sm:$0x3] %vm84, %v83
    // Predicated region
    $region14: #{linear_pallas.1} parent=1 // pred_check
      _
    $region15: #{linear_pallas.1} parent=1 // pred_check_branch
      %87 = sbr.rel (0) target = $region17
    $region16: #{linear_pallas.1} parent=1 // pred_region
      %s89 = ssub.s32 32, 32
      %90 = vsyncadd [#allocation3], %s89
      %s92 = sshll.u32 [#allocation2], 4
      %s93 = int_to_ptr.vmem [resolvable:$true] %s92
      %95 = dma.vmem_to_hbm [thread:$0]  %s93, 32, %s3, [#allocation3]
    $region17: #{linear_pallas.1} parent=1 // pred_fallthru
      _
    // Predicated region
    $region18: #{linear_pallas.1} parent=1 // pred_check
      _
    $region19: #{linear_pallas.1} parent=1 // pred_check_branch
      %97 = sbr.rel (0) target = $region21
    $region20: #{linear_pallas.1} parent=1 // pred_region
      %98 = dma.done [#allocation3], 32
    $region21: #{linear_pallas.1} parent=1 // pred_fallthru
      _
    %99 = vsyncpa [#allocation3], 1

</llo_original>
